<compile_context>
chip_gen: v5e
topology: v5e:2x2
jax: 0.10.0
libtpu: 0.0.40
codegen_flags: <defaults>
</compile_context>

<pallas_src>
import functools

import jax
import jax.numpy as jnp
from jax.experimental import pallas as pl
from jax.experimental.pallas import tpu as pltpu


def _round_up(x, m):
    return ((x + m - 1) // m) * m


def _sublane(dtype):
    # packed-sublane multiple: 8 for 32-bit, 16 for bf16, 32 for 8-bit
    return max(8, 32 // jnp.dtype(dtype).itemsize)


def _tpu_hw_info():
    """(device_kind_lowercase, vmem_capacity_bytes) with safe fallbacks."""
    kind = ""
    try:
        kind = jax.devices()[0].device_kind.lower()
    except Exception:
        pass
    vmem = None
    try:
        vmem = int(pltpu.get_tpu_info().vmem_capacity_bytes)
    except Exception:
        vmem = None
    if not vmem or vmem <= 0:
        vmem = (64 if "v7" in kind else 128) * 1024 * 1024
    return kind, vmem


def _prep_2d(a, rows, cols, dtype):
    """Cast + zero-pad to (rows, cols) only when actually needed (static checks)."""
    if a.dtype != dtype:
        a = a.astype(dtype)
    r, c = a.shape
    if r != rows or c != cols:
        a = jnp.pad(a, ((0, rows - r), (0, cols - c)))
    return a


def _gelu(h, approximate):
    if approximate:
        # tanh approximation -> EUP (separate VLIW slot, overlaps with MXU)
        return jax.nn.gelu(h, approximate=True)
    # exact erf matches torch nn.GELU() default
    return 0.5 * h * (1.0 + jax.lax.erf(h * 0.7071067811865476))


# ----------------------------------------------------------------------------------
# Kernels
# ----------------------------------------------------------------------------------
def _mlp_kernel_resident(x_ref, w1_ref, b1_ref, w2_ref, b2_ref, o_ref,
                         *, approximate_gelu=False):
    # Weights fully VMEM-resident: single fused fc1 -> GELU -> fc2 per M tile.
    h = jnp.dot(x_ref[...], w1_ref[...], preferred_element_type=jnp.float32)
    h = h + b1_ref[...]
    h = _gelu(h, approximate_gelu)
    # dropout(p=0.0) is identity
    out = jnp.dot(h.astype(w2_ref.dtype), w2_ref[...],
                  preferred_element_type=jnp.float32) + b2_ref[...]
    o_ref[...] = out.astype(o_ref.dtype)


def _mlp_kernel_stream(x_ref, w1_ref, b1_ref, w2_ref, b2_ref, o_ref, acc_ref,
                       *, approximate_gelu=False):
    # Hidden-dim streaming: grid = (M tiles, H chunks); acc_ref is the f32 accumulator.
    h_idx = pl.program_id(1)

    h = jnp.dot(x_ref[...], w1_ref[...], preferred_element_type=jnp.float32)
    h = h + b1_ref[...]
    h = _gelu(h, approximate_gelu)
    partial = jnp.dot(h.astype(w2_ref.dtype), w2_ref[...],
                      preferred_element_type=jnp.float32)

    # First H step writes directly (saves a full zero-init store + reload per M tile).
    @pl.when(h_idx == 0)
    def _():
        acc_ref[...] = partial

    @pl.when(h_idx > 0)
    def _():
        acc_ref[...] += partial

    @pl.when(h_idx == pl.num_programs(1) - 1)
    def _():
        o_ref[...] = (acc_ref[...] + b2_ref[...]).astype(o_ref.dtype)


# ----------------------------------------------------------------------------------
# Wrapper
# ----------------------------------------------------------------------------------
@functools.partial(
    jax.jit,
    static_argnames=("tile_m", "tile_h", "compute_dtype", "weights_resident",
                     "approximate_gelu"),
)
def mlp_pallas(x, w1, b1, w2, b2, *, tile_m=None, tile_h=None, compute_dtype=None,
               weights_resident=None, approximate_gelu=False):
    """x: (..., C_in) -> (..., C_out).

    w1: (C_in, H), b1: (H,), w2: (H, C_out), b2: (C_out,)  (torch weights transposed).
    compute_dtype: e.g. jnp.bfloat16 halves HBM/VMEM traffic (strongly recommended on
        v5e); accumulation stays f32.
    weights_resident: None = auto (fits-in-VMEM check), True/False to force a path.
    approximate_gelu: use the tanh approximation (EUP) instead of exact erf.
    """
    orig_shape = x.shape
    out_dtype = x.dtype
    c_in = orig_shape[-1]
    c_hid = w1.shape[1]
    c_out = w2.shape[1]
    cdt = jnp.dtype(compute_dtype) if compute_dtype is not None else jnp.dtype(x.dtype)

    x2d = x.reshape(-1, c_in)
    m = x2d.shape[0]

    kind, vmem_cap = _tpu_hw_info()
    budget = int(0.85 * vmem_cap)          # hardware-aware VMEM budget (v7x = 64 MiB)

    cs = jnp.dtype(cdt).itemsize
    osz = jnp.dtype(out_dtype).itemsize
    sub = max(_sublane(cdt), _sublane(out_dtype))

    # lane-dense padded feature dims
    c_in_p = _round_up(c_in, 128)
    c_out_p = _round_up(c_out, 128)
    hid128 = _round_up(c_hid, 128)

    # --- M tiling: big tiles = arithmetic intensity; keep >=2 tiles for megacore ----
    if tile_m is None:
        tile_m = 1024 if "v6" in kind else 512     # v6e has 128 MiB VMEM; v5e/v7x: 512
    m_sub = _round_up(m, sub)
    tm = _round_up(min(tile_m, m_sub), sub)
    if m_sub // tm < 2 and m_sub >= 2 * sub:
        tm = _round_up((m_sub + 1) // 2, sub)      # feed both TensorCores on v7x

    # --- H tiling (streaming path only) ---------------------------------------------
    if tile_h is None:
        tile_h = 512
    th = _round_up(min(tile_h, hid128), 128)

    # --- VMEM working-set estimates (include fc1 intermediate + its cast copy) -------
    def wb_resident(tm_):
        return (2 * tm_ * c_in_p * cs              # x tile (double-buffered)
                + 2 * c_in_p * hid128 * cs         # w1 (conservative x2)
                + hid128 * 4                       # b1 (f32)
                + 2 * hid128 * c_out_p * cs        # w2 (conservative x2)
                + c_out_p * 4                      # b2 (f32)
                + 2 * tm_ * c_out_p * osz          # output tile
                + tm_ * hid128 * 4                 # fc1 intermediate (f32)
                + tm_ * hid128 * cs)               # compute-dtype cast for fc2 matmul

    def wb_stream(tm_, th_):
        return (2 * tm_ * c_in_p * cs
                + 2 * c_in_p * th_ * cs
                + 2 * th_ * 4
                + 2 * th_ * c_out_p * cs
                + 2 * c_out_p * 4
                + 2 * tm_ * c_out_p * osz
                + tm_ * c_out_p * 4                # f32 accumulator scratch
                + tm_ * th_ * 4                    # fc1 intermediate (f32)
                + tm_ * th_ * cs)                  # cast copy

    use_resident = weights_resident
    if use_resident is None:
        use_resident = wb_resident(tm) <= budget

    if use_resident:
        while wb_resident(tm) > budget and tm > sub:
            tm = max(sub, _round_up(tm // 2, sub))
        hid_p = hid128
        working = wb_resident(tm)
    else:
        while wb_stream(tm, th) > budget and th > 128:
            th = max(128, _round_up(th // 2, 128))
        while wb_stream(tm, th) > budget and tm > sub:
            tm = max(sub, _round_up(tm // 2, sub))
        hid_p = _round_up(hid128, th)
        working = wb_stream(tm, th)

    m_p = _round_up(m_sub, tm)

    vmem_limit = int(min(max(working * 1.2, 32 * 1024 * 1024), budget))

    # --- prepare inputs: cast/zero-pad only when not already aligned -----------------
    # (zero padding is exact: padded Cin cols are 0, padded hidden units have zero
    #  weights+bias -> gelu(0)*0 rows contribute nothing; padded Cout cols sliced off)
    # TODO(synk): for repeated forwards, pre-pad/cast the weights once outside this call.
    x_p = _prep_2d(x2d, m_p, c_in_p, cdt)
    w1_p = _prep_2d(w1, c_in_p, hid_p, cdt)
    w2_p = _prep_2d(w2, hid_p, c_out_p, cdt)
    b1_p = _prep_2d(b1.reshape(1, -1), 1, hid_p, jnp.float32)
    b2_p = _prep_2d(b2.reshape(1, -1), 1, c_out_p, jnp.float32)

    cost = pl.CostEstimate(
        flops=2 * m_p * (c_in_p * hid_p + hid_p * c_out_p),
        transcendentals=m_p * hid_p,
        bytes_accessed=int(
            x_p.size * cs + w1_p.size * cs + w2_p.size * cs
            + b1_p.size * 4 + b2_p.size * 4 + m_p * c_out_p * osz
        ),
    )

    if use_resident:
        kernel = functools.partial(_mlp_kernel_resident,
                                   approximate_gelu=approximate_gelu)
        out_p = pl.pallas_call(
            kernel,
            out_shape=jax.ShapeDtypeStruct((m_p, c_out_p), out_dtype),
            grid_spec=pltpu.PrefetchScalarGridSpec(
                num_scalar_prefetch=0,
                grid=(m_p // tm,),
                in_specs=[
                    pl.BlockSpec((tm, c_in_p), lambda i: (i, 0)),
                    pl.BlockSpec((c_in_p, hid_p), lambda i: (0, 0)),   # resident
                    pl.BlockSpec((1, hid_p), lambda i: (0, 0)),        # resident
                    pl.BlockSpec((hid_p, c_out_p), lambda i: (0, 0)),  # resident
                    pl.BlockSpec((1, c_out_p), lambda i: (0, 0)),      # resident
                ],
                out_specs=pl.BlockSpec((tm, c_out_p), lambda i: (i, 0)),
            ),
            compiler_params=pltpu.CompilerParams(
                dimension_semantics=("parallel",),
                vmem_limit_bytes=vmem_limit,
            ),
            cost_estimate=cost,
        )(x_p, w1_p, b1_p, w2_p, b2_p)
    else:
        kernel = functools.partial(_mlp_kernel_stream,
                                   approximate_gelu=approximate_gelu)
        out_p = pl.pallas_call(
            kernel,
            out_shape=jax.ShapeDtypeStruct((m_p, c_out_p), out_dtype),
            grid_spec=pltpu.PrefetchScalarGridSpec(
                num_scalar_prefetch=0,
                grid=(m_p // tm, hid_p // th),
                in_specs=[
                    pl.BlockSpec((tm, c_in_p), lambda i, h: (i, 0)),
                    pl.BlockSpec((c_in_p, th), lambda i, h: (0, h)),
                    pl.BlockSpec((1, th), lambda i, h: (0, h)),
                    pl.BlockSpec((th, c_out_p), lambda i, h: (h, 0)),
                    pl.BlockSpec((1, c_out_p), lambda i, h: (0, 0)),
                ],
                out_specs=pl.BlockSpec((tm, c_out_p), lambda i, h: (i, 0)),
                scratch_shapes=[pltpu.VMEM((tm, c_out_p), jnp.float32)],
            ),
            compiler_params=pltpu.CompilerParams(
                dimension_semantics=("parallel", "arbitrary"),
                vmem_limit_bytes=vmem_limit,
            ),
            cost_estimate=cost,
        )(x_p, w1_p, b1_p, w2_p, b2_p)

    out2d = out_p[:m, :c_out]
    return out2d.reshape(*orig_shape[:-1], c_out)


# ----------------------------------------------------------------------------------
# Reference / params / test
# ----------------------------------------------------------------------------------
def init_mlp_params(key, in_features, hidden_features, out_features, dtype=jnp.float32):
    """Deterministic synthetic params. Shapes mirror nn.Linear but stored transposed."""
    k1, k2, k3, k4 = jax.random.split(key, 4)
    w1 = jax.random.normal(k1, (in_features, hidden_features), dtype) * 0.1
    b1 = jax.random.normal(k2, (hidden_features,), dtype) * 0.1
    w2 = jax.random.normal(k3, (hidden_features, out_features), dtype) * 0.1
    b2 = jax.random.normal(k4, (out_features,), dtype) * 0.1
    return w1, b1, w2, b2


def mlp_reference(x, w1, b1, w2, b2):
    """Pure-JAX reference identical to the PyTorch forward (drop=0.0)."""
    h = x @ w1 + b1
    h = jax.nn.gelu(h, approximate=False)
    return h @ w2 + b2


if __name__ == "__main__":
    key = jax.random.PRNGKey(0)
    kx, kp, kp2 = jax.random.split(key, 3)

    # Small shapes consistent with a transformer-style Mlp: (batch, seq, in_features)
    B, N, C_IN, C_HID = 2, 8, 32, 64
    x = jax.random.normal(kx, (B, N, C_IN), jnp.float32)
    w1, b1, w2, b2 = init_mlp_params(kp, C_IN, C_HID, C_IN)
    ref = mlp_reference(x, w1, b1, w2, b2)

    # 1) auto path (weights-resident fast path for these shapes): exact parity
    out = jax.block_until_ready(mlp_pallas(x, w1, b1, w2, b2))
    assert out.shape == (B, N, C_IN), out.shape
    assert jnp.allclose(out, ref, atol=1e-5, rtol=1e-5), float(jnp.max(jnp.abs(out - ref)))

    # 2) forced hidden-dim streaming path (multi-step H reduction): exact parity
    C_HID2 = 256
    w1b, b1b, w2b, b2b = init_mlp_params(kp2, C_IN, C_HID2, C_IN)
    ref2 = mlp_reference(x, w1b, b1b, w2b, b2b)
    out_s = jax.block_until_ready(
        mlp_pallas(x, w1b, b1b, w2b, b2b, weights_resident=False, tile_h=128)
    )
    assert out_s.shape == (B, N, C_IN), out_s.shape
    assert jnp.allclose(out_s, ref2, atol=1e-5, rtol=1e-5), float(
        jnp.max(jnp.abs(out_s - ref2))
    )

    # 3) bf16 compute path (f32 accumulation): loose tolerance
    out_bf16 = jax.block_until_ready(
        mlp_pallas(x, w1, b1, w2, b2, compute_dtype=jnp.bfloat16)
    )
    assert out_bf16.shape == (B, N, C_IN), out_bf16.shape
    assert jnp.allclose(out_bf16, ref, atol=5e-2, rtol=5e-2), float(
        jnp.max(jnp.abs(out_bf16 - ref))
    )

    print("KERNEL_OK")
</pallas_src>

<mosaic_0001>
module attributes {stable_mosaic.version = 11 : i64} {
  func.func @_mlp_kernel_resident(%arg0: i32, %arg1: memref<8x128xf32, #tpu.memory_space<vmem>>, %arg2: memref<128x128xf32, #tpu.memory_space<vmem>>, %arg3: memref<1x128xf32, #tpu.memory_space<vmem>>, %arg4: memref<128x128xf32, #tpu.memory_space<vmem>>, %arg5: memref<1x128xf32, #tpu.memory_space<vmem>>, %arg6: memref<8x128xf32, #tpu.memory_space<vmem>>) attributes {dimension_semantics = [#tpu.dimension_semantics<parallel>], iteration_bounds = array<i64: 2>, scalar_prefetch = 0 : i64, scratch_operands = 0 : i64, tpu.core_type = #tpu.core_type<tc>, window_params = [{transform_indices = @transform_0, window_bounds = array<i64: 8, 128>}, {pipeline_mode = #tpu.pipeline_mode<synchronous>, transform_indices = @transform_1, window_bounds = array<i64: 128, 128>}, {pipeline_mode = #tpu.pipeline_mode<synchronous>, transform_indices = @transform_2, window_bounds = array<i64: 1, 128>}, {pipeline_mode = #tpu.pipeline_mode<synchronous>, transform_indices = @transform_3, window_bounds = array<i64: 128, 128>}, {pipeline_mode = #tpu.pipeline_mode<synchronous>, transform_indices = @transform_4, window_bounds = array<i64: 1, 128>}, {transform_indices = @transform_5, window_bounds = array<i64: 8, 128>}]} {
    %c0 = arith.constant 0 : index
    %c0_0 = arith.constant 0 : index
    %0 = vector.load %arg1[%c0, %c0_0] : memref<8x128xf32, #tpu.memory_space<vmem>>, vector<8x128xf32>
    %c0_1 = arith.constant 0 : index
    %c0_2 = arith.constant 0 : index
    %1 = vector.load %arg2[%c0_1, %c0_2] : memref<128x128xf32, #tpu.memory_space<vmem>>, vector<128x128xf32>
    %cst = arith.constant dense<0.000000e+00> : vector<8x128xf32>
    %2 = tpu.matmul %0, %1, %cst {dimension_numbers = #tpu.dot_dimension_numbers<[1], [0], [0], [1], [0, 0, 1, 1], [], []>} : vector<8x128xf32>, vector<128x128xf32>, vector<8x128xf32> -> vector<8x128xf32>
    %c0_3 = arith.constant 0 : index
    %c0_4 = arith.constant 0 : index
    %3 = vector.load %arg3[%c0_3, %c0_4] : memref<1x128xf32, #tpu.memory_space<vmem>>, vector<1x128xf32>
    %4 = vector.broadcast %3 : vector<1x128xf32> to vector<8x128xf32>
    %5 = arith.addf %2, %4 : vector<8x128xf32>
    %cst_5 = arith.constant 5.000000e-01 : f32
    %6 = vector.broadcast %cst_5 : f32 to vector<8x128xf32>
    %7 = arith.mulf %6, %5 : vector<8x128xf32>
    %cst_6 = arith.constant 0.707106769 : f32
    %8 = vector.broadcast %cst_6 : f32 to vector<8x128xf32>
    %9 = arith.mulf %5, %8 : vector<8x128xf32>
    %10 = math.erf %9 : vector<8x128xf32>
    %cst_7 = arith.constant 1.000000e+00 : f32
    %11 = vector.broadcast %cst_7 : f32 to vector<8x128xf32>
    %12 = arith.addf %11, %10 : vector<8x128xf32>
    %13 = arith.mulf %7, %12 : vector<8x128xf32>
    %c0_8 = arith.constant 0 : index
    %c0_9 = arith.constant 0 : index
    %14 = vector.load %arg4[%c0_8, %c0_9] : memref<128x128xf32, #tpu.memory_space<vmem>>, vector<128x128xf32>
    %cst_10 = arith.constant dense<0.000000e+00> : vector<8x128xf32>
    %15 = tpu.matmul %13, %14, %cst_10 {dimension_numbers = #tpu.dot_dimension_numbers<[1], [0], [0], [1], [0, 0, 1, 1], [], []>} : vector<8x128xf32>, vector<128x128xf32>, vector<8x128xf32> -> vector<8x128xf32>
    %c0_11 = arith.constant 0 : index
    %c0_12 = arith.constant 0 : index
    %16 = vector.load %arg5[%c0_11, %c0_12] : memref<1x128xf32, #tpu.memory_space<vmem>>, vector<1x128xf32>
    %17 = vector.broadcast %16 : vector<1x128xf32> to vector<8x128xf32>
    %18 = arith.addf %15, %17 : vector<8x128xf32>
    %c0_13 = arith.constant 0 : index
    %c0_14 = arith.constant 0 : index
    %19 = vector.load %arg6[%c0_13, %c0_14] : memref<8x128xf32, #tpu.memory_space<vmem>>, vector<8x128xf32>
    tpu.vector_store %arg6[%c0_13, %c0_14], %18 {strides = array<i32>} : memref<8x128xf32, #tpu.memory_space<vmem>>, vector<8x128xf32>,
    return
  }
  func.func @transform_0(%arg0: i32) -> (i32, i32) {
    %c0_i32 = arith.constant 0 : i32
    %c0_i32_0 = arith.constant 0 : i32
    return %arg0, %c0_i32 : i32, i32
  }
  func.func @transform_1(%arg0: i32) -> (i32, i32) {
    %c0_i32 = arith.constant 0 : i32
    %c0_i32_0 = arith.constant 0 : i32
    %c0_i32_1 = arith.constant 0 : i32
    return %c0_i32, %c0_i32_0 : i32, i32
  }
  func.func @transform_2(%arg0: i32) -> (i32, i32) {
    %c0_i32 = arith.constant 0 : i32
    %c0_i32_0 = arith.constant 0 : i32
    %c0_i32_1 = arith.constant 0 : i32
    return %c0_i32, %c0_i32_0 : i32, i32
  }
  func.func @transform_3(%arg0: i32) -> (i32, i32) {
    %c0_i32 = arith.constant 0 : i32
    %c0_i32_0 = arith.constant 0 : i32
    %c0_i32_1 = arith.constant 0 : i32
    return %c0_i32, %c0_i32_0 : i32, i32
  }
  func.func @transform_4(%arg0: i32) -> (i32, i32) {
    %c0_i32 = arith.constant 0 : i32
    %c0_i32_0 = arith.constant 0 : i32
    %c0_i32_1 = arith.constant 0 : i32
    return %c0_i32, %c0_i32_0 : i32, i32
  }
  func.func @transform_5(%arg0: i32) -> (i32, i32) {
    %c0_i32 = arith.constant 0 : i32
    %c0_i32_0 = arith.constant 0 : i32
    return %arg0, %c0_i32 : i32, i32
  }
}

</mosaic_0001>

<llo_original>
// kernel: mlp_pallas.1
$region0: #{mlp_pallas.1}
  #allocation0 [shape = 'u32[]', space=smem, size = 0x4, offset = 0x4, fixed_abs, tag = 'smem constant byte address 0x4 - core index']
  #allocation1 [shape = 'u32[72,128]{1,0:T(1,128)}', space=vmem, size = 0x9000, scoped, tag = 'internal scratch']
  %s0 = inlined_call_operand.vmem [shape: f32[16,128], index: 0, kind: input, shape index: {}]
  %s1 = inlined_call_operand.vmem [shape: f32[128,128], index: 1, kind: input, shape index: {}]
  %s2 = inlined_call_operand.vmem [shape: f32[1,128], index: 2, kind: input, shape index: {}]
  %s3 = inlined_call_operand.vmem [shape: f32[128,128], index: 3, kind: input, shape index: {}]
  %s4 = inlined_call_operand.vmem [shape: f32[1,128], index: 4, kind: input, shape index: {}]
  %s5 = inlined_call_operand.vmem [shape: f32[16,128], index: 5, kind: output, shape index: {}]
  %s6 = sld [smem:[#allocation0]]
  $region53: #{mlp_pallas.1} parent=0
    _
  %s8 = ssub.s32 1, %s6
  %s9 = scalar_select 0, %s8, %s6
  loop: start=0, step=1, limit=4
  $region2: #{mlp_pallas.1} parent=0 // loop_pre_header
    _
  $region3: #{mlp_pallas.1} parent=0 // loop_header
    %s11 = sphi 0, %s15
    %p12 = scmp.ge.s32.totalorder %s11, 4
    %s21 = sphi 0, %s23
    %s24 = sphi 0, %s21
    %s25 = sphi 0, %s24
    %s41 = sphi 0, %s25
    %s45 = sphi 0, %s45
    %s47 = sphi 0, %s45
    %s48 = sphi 0, %s47
    %s62 = sphi 0, %s48
    %s66 = sphi 0, %s66
    %s68 = sphi 0, %s66
    %s69 = sphi 0, %s68
    %s83 = sphi 0, %s69
    %s87 = sphi 0, %s87
    %s89 = sphi 0, %s87
    %s90 = sphi 0, %s89
    %s104 = sphi 0, %s90
    %s108 = sphi 0, %s108
    %s110 = sphi 0, %s108
    %s111 = sphi 0, %s110
    %s125 = sphi 0, %s111
    %s131 = sphi 0, %s133
    %s134 = sphi 0, %s131
    %s135 = sphi 0, %s134
    %s151 = sphi 0, %s135
  $region4: #{mlp_pallas.1} parent=0 // loop_header_branch
    %14 = sbr.rel (%p12) target = $region8
  $region5: #{mlp_pallas.1} parent=0 // loop_body
    %s16 = ssub.s32 %s11, 1
    %s17 = ssub.s32 %s11, 2
    %s18 = sadd.s32 %s11, 1
    %s19 = ssub.s32 %s11, %s18
    %p20 = scmp.eq.s32.totalorder %s19, 0
    %s22 = sadd.s32 %s21, 1
    %s23 = scalar_select %p20, %s21, %s22
    %p26 = pneg %p20
    %p27 = scmp.eq.s32.totalorder %s11, 1
    %p28 = por %p26, %p27
    %p29 = scmp.ne.s32.totalorder %s21, %s24
    %p30 = scmp.eq.s32.totalorder %s11, 0
    %p31 = por %p29, %p30
    %p32 = scmp.ne.s32.totalorder %s21, %s24
    %p33 = scmp.eq.s32.totalorder %s16, 1
    %p34 = por %p32, %p33
    %p35 = scmp.ne.s32.totalorder %s24, %s25
    %p36 = scmp.eq.s32.totalorder %s16, 0
    %p37 = por %p35, %p36
    %p38 = scmp.ne.s32.totalorder %s24, %s25
    %p39 = scmp.eq.s32.totalorder %s17, 1
    %p40 = por %p38, %p39
    %p42 = scmp.ne.s32.totalorder %s25, %s41
    %p43 = scmp.eq.s32.totalorder %s17, 0
    %p44 = por %p42, %p43
    %s46 = sadd.s32 %s45, 1
    %p49 = scmp.eq.s32.totalorder %s11, 1
    %p50 = scmp.ne.s32.totalorder %s45, %s47
    %p51 = scmp.eq.s32.totalorder %s11, 0
    %p52 = por %p50, %p51
    %p53 = scmp.ne.s32.totalorder %s45, %s47
    %p54 = scmp.eq.s32.totalorder %s16, 1
    %p55 = por %p53, %p54
    %p56 = scmp.ne.s32.totalorder %s47, %s48
    %p57 = scmp.eq.s32.totalorder %s16, 0
    %p58 = por %p56, %p57
    %p59 = scmp.ne.s32.totalorder %s47, %s48
    %p60 = scmp.eq.s32.totalorder %s17, 1
    %p61 = por %p59, %p60
    %p63 = scmp.ne.s32.totalorder %s48, %s62
    %p64 = scmp.eq.s32.totalorder %s17, 0
    %p65 = por %p63, %p64
    %s67 = sadd.s32 %s66, 1
    %p70 = scmp.eq.s32.totalorder %s11, 1
    %p71 = scmp.ne.s32.totalorder %s66, %s68
    %p72 = scmp.eq.s32.totalorder %s11, 0
    %p73 = por %p71, %p72
    %p74 = scmp.ne.s32.totalorder %s66, %s68
    %p75 = scmp.eq.s32.totalorder %s16, 1
    %p76 = por %p74, %p75
    %p77 = scmp.ne.s32.totalorder %s68, %s69
    %p78 = scmp.eq.s32.totalorder %s16, 0
    %p79 = por %p77, %p78
    %p80 = scmp.ne.s32.totalorder %s68, %s69
    %p81 = scmp.eq.s32.totalorder %s17, 1
    %p82 = por %p80, %p81
    %p84 = scmp.ne.s32.totalorder %s69, %s83
    %p85 = scmp.eq.s32.totalorder %s17, 0
    %p86 = por %p84, %p85
    %s88 = sadd.s32 %s87, 1
    %p91 = scmp.eq.s32.totalorder %s11, 1
    %p92 = scmp.ne.s32.totalorder %s87, %s89
    %p93 = scmp.eq.s32.totalorder %s11, 0
    %p94 = por %p92, %p93
    %p95 = scmp.ne.s32.totalorder %s87, %s89
    %p96 = scmp.eq.s32.totalorder %s16, 1
    %p97 = por %p95, %p96
    %p98 = scmp.ne.s32.totalorder %s89, %s90
    %p99 = scmp.eq.s32.totalorder %s16, 0
    %p100 = por %p98, %p99
    %p101 = scmp.ne.s32.totalorder %s89, %s90
    %p102 = scmp.eq.s32.totalorder %s17, 1
    %p103 = por %p101, %p102
    %p105 = scmp.ne.s32.totalorder %s90, %s104
    %p106 = scmp.eq.s32.totalorder %s17, 0
    %p107 = por %p105, %p106
    %s109 = sadd.s32 %s108, 1
    %p112 = scmp.eq.s32.totalorder %s11, 1
    %p113 = scmp.ne.s32.totalorder %s108, %s110
    %p114 = scmp.eq.s32.totalorder %s11, 0
    %p115 = por %p113, %p114
    %p116 = scmp.ne.s32.totalorder %s108, %s110
    %p117 = scmp.eq.s32.totalorder %s16, 1
    %p118 = por %p116, %p117
    %p119 = scmp.ne.s32.totalorder %s110, %s111
    %p120 = scmp.eq.s32.totalorder %s16, 0
    %p121 = por %p119, %p120
    %p122 = scmp.ne.s32.totalorder %s110, %s111
    %p123 = scmp.eq.s32.totalorder %s17, 1
    %p124 = por %p122, %p123
    %p126 = scmp.ne.s32.totalorder %s111, %s125
    %p127 = scmp.eq.s32.totalorder %s17, 0
    %p128 = por %p126, %p127
    %s129 = ssub.s32 %s11, %s18
    %p130 = scmp.eq.s32.totalorder %s129, 0
    %s132 = sadd.s32 %s131, 1
    %s133 = scalar_select %p130, %s131, %s132
    %p136 = pneg %p130
    %p137 = scmp.eq.s32.totalorder %s11, 1
    %p138 = por %p136, %p137
    %p139 = scmp.ne.s32.totalorder %s131, %s134
    %p140 = scmp.eq.s32.totalorder %s11, 0
    %p141 = por %p139, %p140
    %p142 = scmp.ne.s32.totalorder %s131, %s134
    %p143 = scmp.eq.s32.totalorder %s16, 1
    %p144 = por %p142, %p143
    %p145 = scmp.ne.s32.totalorder %s134, %s135
    %p146 = scmp.eq.s32.totalorder %s16, 0
    %p147 = por %p145, %p146
    %p148 = scmp.ne.s32.totalorder %s134, %s135
    %p149 = scmp.eq.s32.totalorder %s17, 1
    %p150 = por %p148, %p149
    %p152 = scmp.ne.s32.totalorder %s135, %s151
    %p153 = scmp.eq.s32.totalorder %s17, 0
    %p154 = por %p152, %p153
    %p155 = scmp.le.s32.totalorder 1, %s11
    %p156 = scmp.lt.s32.totalorder %s11, 3
    %p157 = pnand %p155, %p156
    %p158 = pneg %p157
    // Predicated region
    $region9: #{mlp_pallas.1} parent=5 // pred_check
      _
    $region10: #{mlp_pallas.1} parent=5 // pred_check_branch
      %160 = sbr.rel (%p157) target = $region12
    $region11: #{mlp_pallas.1} parent=5 // pred_region
      %s161 = ssub.s32 %s11, 1
      // Predicated region
      $region13: #{mlp_pallas.1} parent=11 // pred_check
        %p162 = pneg %p58
      $region14: #{mlp_pallas.1} parent=11 // pred_check_branch
        %164 = sbr.rel (%p162) target = $region16
      $region15: #{mlp_pallas.1} parent=11 // pred_region
        _
      $region16: #{mlp_pallas.1} parent=11 // pred_fallthru
        _
      // Predicated region
      $region17: #{mlp_pallas.1} parent=11 // pred_check
        %p165 = pneg %p79
      $region18: #{mlp_pallas.1} parent=11 // pred_check_branch
        %167 = sbr.rel (%p165) target = $region20
      $region19: #{mlp_pallas.1} parent=11 // pred_region
        _
      $region20: #{mlp_pallas.1} parent=11 // pred_fallthru
        _
      // Predicated region
      $region21: #{mlp_pallas.1} parent=11 // pred_check
        %p168 = pneg %p100
      $region22: #{mlp_pallas.1} parent=11 // pred_check_branch
        %170 = sbr.rel (%p168) target = $region24
      $region23: #{mlp_pallas.1} parent=11 // pred_region
        _
      $region24: #{mlp_pallas.1} parent=11 // pred_fallthru
        _
      // Predicated region
      $region25: #{mlp_pallas.1} parent=11 // pred_check
        %p171 = pneg %p121
      $region26: #{mlp_pallas.1} parent=11 // pred_check_branch
        %173 = sbr.rel (%p171) target = $region28
      $region27: #{mlp_pallas.1} parent=11 // pred_region
        _
      $region28: #{mlp_pallas.1} parent=11 // pred_fallthru
        _
    $region12: #{mlp_pallas.1} parent=5 // pred_fallthru
      _
    %p174 = scmp.lt.s32.totalorder %s11, 2
    // Predicated region
    $region29: #{mlp_pallas.1} parent=5 // pred_check
      %p175 = pneg %p174
    $region30: #{mlp_pallas.1} parent=5 // pred_check_branch
      %177 = sbr.rel (%p175) target = $region32
    $region31: #{mlp_pallas.1} parent=5 // pred_region
      // Predicated region
      $region33: #{mlp_pallas.1} parent=31 // pred_check
        %p178 = pneg %p31
      $region34: #{mlp_pallas.1} parent=31 // pred_check_branch
        %180 = sbr.rel (%p178) target = $region36
      $region35: #{mlp_pallas.1} parent=31 // pred_region
        %p181 = scmp.lt.s32.totalorder %s11, 1
        %s182 = scalar_select %p181, %s11, 1
        %s183 = smul.addr %s182, 8
        %s184 = scalar_lea.vmem %s0, %s183
      $region36: #{mlp_pallas.1} parent=31 // pred_fallthru
        _
    $region32: #{mlp_pallas.1} parent=5 // pred_fallthru
      _
    %p185 = scmp.le.s32.totalorder 1, %s11
    %p186 = scmp.lt.s32.totalorder %s11, 3
    %p187 = pnand %p185, %p186
    %p188 = pneg %p187
    // Predicated region
    $region37: #{mlp_pallas.1} parent=5 // pred_check
      _
    $region38: #{mlp_pallas.1} parent=5 // pred_check_branch
      %190 = sbr.rel (%p187) target = $region40
    $region39: #{mlp_pallas.1} parent=5 // pred_region
      %s191 = ssub.s32 %s11, 1
      %p192 = scmp.lt.s32.totalorder %s16, 1
      %s193 = scalar_select %p192, %s16, 1
      %s194 = smul.addr %s193, 8
      %s195 = scalar_lea.vmem %s0, %s194
      %p196 = pneg %p37
      %p197 = pneg %p34
      %p198 = pneg %p58
      %p199 = pneg %p55
      %p200 = pneg %p79
      %p201 = pneg %p76
      %p202 = pneg %p100
      %p203 = pneg %p97
      %p204 = pneg %p121
      %p205 = pneg %p118
      %p206 = pneg %p147
      %p207 = pneg %p144
      %p208 = scmp.lt.s32.totalorder %s16, 1
      %s209 = scalar_select %p208, %s16, 1
      %s210 = smul.addr %s209, 8
      %s211 = scalar_lea.vmem %s5, %s210
      %p212 = scmp.lt.s32.totalorder %s16, 1
      %s213 = scalar_select %p212, %s16, 1
      %s214 = smul.addr %s213, 8
      %s215 = scalar_lea.vmem %s0, %s214
      %p216 = scmp.lt.s32.totalorder %s16, 1
      %s217 = scalar_select %p216, %s16, 1
      %s218 = smul.addr %s217, 8
      %s219 = scalar_lea.vmem %s5, %s218
      %v220 = vld [vmem:[%s215] sm:$0xff]
      %v221 = vld [vmem:[%s1] sm:$0xff]
      %v222 = vld [vmem:[%s1 + $0x8] sm:$0xff]
      %v223 = vld [vmem:[%s1 + $0x10] sm:$0xff]
      %v224 = vld [vmem:[%s1 + $0x18] sm:$0xff]
      %v225 = vld [vmem:[%s1 + $0x20] sm:$0xff]
      %v226 = vld [vmem:[%s1 + $0x28] sm:$0xff]
      %v227 = vld [vmem:[%s1 + $0x30] sm:$0xff]
      %v228 = vld [vmem:[%s1 + $0x38] sm:$0xff]
      %v229 = vld [vmem:[%s1 + $0x40] sm:$0xff]
      %v230 = vld [vmem:[%s1 + $0x48] sm:$0xff]
      %v231 = vld [vmem:[%s1 + $0x50] sm:$0xff]
      %v232 = vld [vmem:[%s1 + $0x58] sm:$0xff]
      %v233 = vld [vmem:[%s1 + $0x60] sm:$0xff]
      %v234 = vld [vmem:[%s1 + $0x68] sm:$0xff]
      %v235 = vld [vmem:[%s1 + $0x70] sm:$0xff]
      %v236 = vld [vmem:[%s1 + $0x78] sm:$0xff]
      %v237 = vld [vmem:[%s2] sm:$0x1]
      %v239 = vperm.slane %v237, 0
      %241 = vmatpush.msra.mxu0 %v236
      %242 = vmatpush.msra.mxu0 %v235
      %243 = vmatpush.msra.mxu0 %v234
      %244 = vmatpush.msra.mxu0 %v233
      %245 = vmatpush.msra.mxu0 %v232
      %246 = vmatpush.msra.mxu0 %v231
      %247 = vmatpush.msra.mxu0 %v230
      %248 = vmatpush.msra.mxu0 %v229
      %249 = vmatpush.msra.mxu0 %v228
      %250 = vmatpush.msra.mxu0 %v227
      %251 = vmatpush.msra.mxu0 %v226
      %252 = vmatpush.msra.mxu0 %v225
      %253 = vmatpush.msra.mxu0 %v224
      %254 = vmatpush.msra.mxu0 %v223
      %255 = vmatpush.msra.mxu0 %v222
      %256 = vmatpush.msra.mxu0 %v221
      %257 = vmatmul.f32.gmra.mxu0 %v220
      %v258 = vpop.f32.mrf.mxu0
      %v259 = vadd.f32 %v239, %v258
      %260 = vdwg.mxu0
      %v261 = vmul.f32 %v259, 0.5
      %v262 = vmul.f32 %v259, 0.70710677
      %v263 = vmul.f32 %v262, %v262
      %v264 = vmin.f32 16.0, %v263
      %v265 = vmul.f32 %v264, 2.1237322e-06
      %v266 = vadd.f32 %v265, 0.00028619796
      %v267 = vmul.f32 %v264, %v266
      %v268 = vadd.f32 %v267, 0.0036580483
      %v269 = vmul.f32 %v264, %v268
      %v270 = vadd.f32 %v269, 0.05243302
      %v271 = vmul.f32 %v264, %v270
      %v272 = vadd.f32 %v271, 0.18741608
      %v273 = vmul.f32 %v264, %v272
      %v274 = vadd.f32 %v273, 1.1283791
      %v275 = vmul.f32 %v262, %v274
      %v276 = vmul.f32 %v264, 3.8918573e-05
      %v277 = vadd.f32 %v276, 0.001143296
      %v278 = vmul.f32 %v264, %v277
      %v279 = vadd.f32 %v278, 0.014752088
      %v280 = vmul.f32 %v264, %v279
      %v281 = vadd.f32 %v280, 0.112945676
      %v282 = vmul.f32 %v264, %v281
      %v283 = vadd.f32 %v282, 0.4994258
      %v284 = vmul.f32 %v264, %v283
      %v285 = vadd.f32 %v284, 1.0
      %v286 = vrcp.pop %v285
      %v287 = vmul.f32 %v285, %v286
      %v288 = vsub.f32 1.0, %v287
      %v289 = vmul.f32 %v286, %v288
      %v290 = vadd.f32 %v286, %v289
      %vm291 = vweird.f32 %v285
      %vm292 = vweird.f32 %v286
      %vm293 = vmor %vm291, %vm292
      %v294 = vsel %vm293, %v286, %v290
      %v295 = vand.u32 2147483647, %v285
      %vm296 = vcmp.eq.f32.partialorder %v295, 8.507059e+37
      %v297 = vand.u32 %v285, 2147483648
      %v298 = vor.u32 1.1754944e-38, %v297
      %v299 = vsel %vm296, %v298, %v294
      %v300 = vmul.f32 %v275, %v299
      %v301 = vmin.f32 %v300, 1.0
      %v302 = vmax.f32 %v301, -1.0
      %v303 = vadd.f32 %v302, 1.0
      %v304 = vmul.f32 %v261, %v303
      %v305 = vld [vmem:[%s3] sm:$0xff]
      %v306 = vld [vmem:[%s3 + $0x8] sm:$0xff]
      %v307 = vld [vmem:[%s3 + $0x10] sm:$0xff]
      %v308 = vld [vmem:[%s3 + $0x18] sm:$0xff]
      %v309 = vld [vmem:[%s3 + $0x20] sm:$0xff]
      %v310 = vld [vmem:[%s3 + $0x28] sm:$0xff]
      %v311 = vld [vmem:[%s3 + $0x30] sm:$0xff]
      %v312 = vld [vmem:[%s3 + $0x38] sm:$0xff]
      %v313 = vld [vmem:[%s3 + $0x40] sm:$0xff]
      %v314 = vld [vmem:[%s3 + $0x48] sm:$0xff]
      %v315 = vld [vmem:[%s3 + $0x50] sm:$0xff]
      %v316 = vld [vmem:[%s3 + $0x58] sm:$0xff]
      %v317 = vld [vmem:[%s3 + $0x60] sm:$0xff]
      %v318 = vld [vmem:[%s3 + $0x68] sm:$0xff]
      %v319 = vld [vmem:[%s3 + $0x70] sm:$0xff]
      %v320 = vld [vmem:[%s3 + $0x78] sm:$0xff]
      %v321 = vld [vmem:[%s4] sm:$0x1]
      %v323 = vperm.slane %v321, 0
      %325 = vmatpush.msra.mxu0 %v320
      %326 = vmatpush.msra.mxu0 %v319
      %327 = vmatpush.msra.mxu0 %v318
      %328 = vmatpush.msra.mxu0 %v317
      %329 = vmatpush.msra.mxu0 %v316
      %330 = vmatpush.msra.mxu0 %v315
      %331 = vmatpush.msra.mxu0 %v314
      %332 = vmatpush.msra.mxu0 %v313
      %333 = vmatpush.msra.mxu0 %v312
      %334 = vmatpush.msra.mxu0 %v311
      %335 = vmatpush.msra.mxu0 %v310
      %336 = vmatpush.msra.mxu0 %v309
      %337 = vmatpush.msra.mxu0 %v308
      %338 = vmatpush.msra.mxu0 %v307
      %339 = vmatpush.msra.mxu0 %v306
      %340 = vmatpush.msra.mxu0 %v305
      %341 = vmatmul.f32.gmra.mxu0 %v304
      %v342 = vpop.f32.mrf.mxu0
      %v343 = vadd.f32 %v323, %v342
      %344 = vdwg.mxu0
      %345 = vst [vmem:[%s219] sm:$0xff] %v343
      %p346 = scmp.lt.s32.totalorder %s16, 1
      %s347 = scalar_select %p346, %s16, 1
      %s348 = smul.addr %s347, 8
      %s349 = scalar_lea.vmem %s5, %s348
      // Predicated region
      $region41: #{mlp_pallas.1} parent=39 // pred_check
        %p350 = pneg %p144
      $region42: #{mlp_pallas.1} parent=39 // pred_check_branch
        %352 = sbr.rel (%p350) target = $region44
      $region43: #{mlp_pallas.1} parent=39 // pred_region
        _
      $region44: #{mlp_pallas.1} parent=39 // pred_fallthru
        _
    $region40: #{mlp_pallas.1} parent=5 // pred_fallthru
      _
    %p353 = scmp.le.s32.totalorder 2, %s11
    // Predicated region
    $region45: #{mlp_pallas.1} parent=5 // pred_check
      %p354 = pneg %p353
    $region46: #{mlp_pallas.1} parent=5 // pred_check_branch
      %356 = sbr.rel (%p354) target = $region48
    $region47: #{mlp_pallas.1} parent=5 // pred_region
      %s357 = ssub.s32 %s11, 2
      // Predicated region
      $region49: #{mlp_pallas.1} parent=47 // pred_check
        %p358 = pneg %p150
      $region50: #{mlp_pallas.1} parent=47 // pred_check_branch
        %360 = sbr.rel (%p358) target = $region52
      $region51: #{mlp_pallas.1} parent=47 // pred_region
        %p361 = scmp.lt.s32.totalorder %s17, 1
        %s362 = scalar_select %p361, %s17, 1
        %s363 = smul.addr %s362, 8
        %s364 = scalar_lea.vmem %s5, %s363
      $region52: #{mlp_pallas.1} parent=47 // pred_fallthru
        _
    $region48: #{mlp_pallas.1} parent=5 // pred_fallthru
      _
  $region6: #{mlp_pallas.1} parent=0 // loop_footer
    %s15 = sadd.s32 1, %s11
  $region7: #{mlp_pallas.1} parent=0 // loop_footer_branch
    %10 = sbr.rel target = $region3
  $region8: #{mlp_pallas.1} parent=0 // loop_exit
    _

</llo_original>
